<compile_context>
chip_gen: v7x
topology: tpu7x:2x2x1
jax: 0.10.0
libtpu: 0.0.40
codegen_flags: <defaults>
</compile_context>

<pallas_src>
import jax
import jax.numpy as jnp
from jax.experimental import pallas as pl
from jax.experimental.pallas import tpu as pltpu

_LANE = 128
# in + out, each double-buffered => 4 x block_bytes of pipeline VMEM.
# 48 MiB leaves headroom over 4 x 8 MiB and stays under v7x's 64 MiB physical
# VMEM (v5e/v6e have 128 MiB physical; their scoped defaults are 16/32 MiB).
_VMEM_LIMIT_BYTES = 48 << 20


def _h_swish_kernel(x_ref, o_ref):
    # h_swish(x) = x * relu6(x + 3) / 6 ; f32 intermediate is free (HBM-bound).
    x = x_ref[...].astype(jnp.float32)
    hs = jnp.clip(x + 3.0, 0.0, 6.0) * (1.0 / 6.0)
    o_ref[...] = (x * hs).astype(o_ref.dtype)


def _cost_estimate(total, itemsize):
    return pl.CostEstimate(
        flops=5 * total,
        transcendentals=0,
        bytes_accessed=2 * total * itemsize,
    )


def _compiler_params():
    return pltpu.CompilerParams(
        dimension_semantics=("parallel",),
        vmem_limit_bytes=_VMEM_LIMIT_BYTES,
    )


def _min_blocks(total_bytes):
    # v7x megacore: shard a "parallel" axis across 2 TCs -> never emit a
    # single-block grid for anything big enough to matter.
    return 2 if total_bytes > (1 << 20) else 1


def _run_2d(flat, total, dtype, dtype_bytes, block_bytes):
    """Aligned fast path: total % 128 == 0, lane-dense (rows, width) slab."""
    # Widest lane-dense last dim that divides total (no padding copy needed;
    # even the width=128 fallback keeps full-width contiguous DMAs).
    width = _LANE
    for w in (1024, 512, 256):
        if total % w == 0:
            width = w
            break
    rows = total // width

    # Packed sublane tile: (8,128) f32, (16,128) bf16, (32,128) int8.
    sublane_mult = max(8, 32 // dtype_bytes)

    block_rows = (block_bytes // (width * dtype_bytes)) // sublane_mult * sublane_mult
    block_rows = max(sublane_mult, block_rows)
    block_rows = min(block_rows, rows)  # block == full dim when slab is small

    if pl.cdiv(rows, block_rows) < _min_blocks(total * dtype_bytes):
        block_rows = pl.cdiv(rows, _min_blocks(total * dtype_bytes))
        block_rows = max(sublane_mult, pl.cdiv(block_rows, sublane_mult) * sublane_mult)
    grid = (pl.cdiv(rows, block_rows),)

    x2d = flat.reshape(rows, width)  # metadata-only for contiguous data
    out2d = pl.pallas_call(
        _h_swish_kernel,
        out_shape=jax.ShapeDtypeStruct((rows, width), dtype),
        grid_spec=pltpu.PrefetchScalarGridSpec(
            num_scalar_prefetch=0,
            grid=grid,
            in_specs=[pl.BlockSpec((block_rows, width), lambda i: (i, 0))],
            out_specs=pl.BlockSpec((block_rows, width), lambda i: (i, 0)),
        ),
        compiler_params=_compiler_params(),
        cost_estimate=_cost_estimate(total, dtype_bytes),
    )(x2d)
    return out2d.reshape(-1)


def _run_1d(flat, total, dtype, dtype_bytes, block_bytes):
    """Ragged path: total % 128 != 0.  No pad, no slice — 1-D blocks with the
    partial last block masked by Pallas."""
    gran = 32 * _LANE  # 4096 elems: covers f32/bf16/int8 packed layouts
    blk = max(gran, (block_bytes // dtype_bytes) // gran * gran)

    mb = _min_blocks(total * dtype_bytes)
    if pl.cdiv(total, blk) < mb:
        blk = max(gran, pl.cdiv(pl.cdiv(total, mb), gran) * gran)
    nblocks = pl.cdiv(total, blk)
    if nblocks == 1:
        blk = total  # single block equal to the full array dim (unmasked)
    grid = (nblocks,)

    return pl.pallas_call(
        _h_swish_kernel,
        out_shape=jax.ShapeDtypeStruct((total,), dtype),
        grid_spec=pltpu.PrefetchScalarGridSpec(
            num_scalar_prefetch=0,
            grid=grid,
            in_specs=[pl.BlockSpec((blk,), lambda i: (i,))],
            out_specs=pl.BlockSpec((blk,), lambda i: (i,)),
        ),
        compiler_params=_compiler_params(),
        cost_estimate=_cost_estimate(total, dtype_bytes),
    )(flat)


def h_swish(x, *, target_block_bytes=8 * 1024 * 1024):
    """Elementwise h_swish on an NCHW (or any-shape) array via Pallas."""
    orig_shape = x.shape
    dtype = x.dtype
    total = x.size
    if total == 0:
        return x

    dtype_bytes = jnp.dtype(dtype).itemsize
    # Cap the block so 4x (in+out, double-buffered) fits the VMEM limit we set.
    block_bytes = min(target_block_bytes, _VMEM_LIMIT_BYTES // 4)

    flat = x.reshape(-1)  # metadata-only for contiguous inputs

    if total % _LANE == 0:
        out_flat = _run_2d(flat, total, dtype, dtype_bytes, block_bytes)
    else:
        out_flat = _run_1d(flat, total, dtype, dtype_bytes, block_bytes)
    return out_flat.reshape(orig_shape)


def h_swish_ref(x):
    return x * (jnp.clip(x + 3.0, 0.0, 6.0) / 6.0)


if __name__ == "__main__":
    key = jax.random.PRNGKey(0)

    # NCHW, same convention as the PyTorch module (aligned fast path).
    x = jax.random.normal(key, (2, 4, 16, 16), dtype=jnp.float32) * 4.0
    out = jax.block_until_ready(h_swish(x))
    ref = h_swish_ref(x)
    assert out.shape == x.shape and out.dtype == x.dtype
    assert jnp.allclose(out, ref, atol=1e-6, rtol=1e-6)

    # Odd shape exercising the pad-free ragged 1-D path.
    x2 = jax.random.normal(jax.random.PRNGKey(0), (2, 3, 7, 5), dtype=jnp.float32) * 4.0
    out2 = jax.block_until_ready(h_swish(x2))
    ref2 = h_swish_ref(x2)
    assert out2.shape == x2.shape and out2.dtype == x2.dtype
    assert jnp.allclose(out2, ref2, atol=1e-6, rtol=1e-6)

    # >1 MiB aligned tensor: exercises the >=2-block (megacore) split path.
    x3 = jax.random.normal(jax.random.PRNGKey(0), (2, 32, 64, 64), dtype=jnp.float32) * 4.0
    out3 = jax.block_until_ready(h_swish(x3))
    ref3 = h_swish_ref(x3)
    assert out3.shape == x3.shape and out3.dtype == x3.dtype
    assert jnp.allclose(out3, ref3, atol=1e-6, rtol=1e-6)

    print("KERNEL_OK")
</pallas_src>

<mosaic_0001>
module attributes {stable_mosaic.version = 11 : i64} {
  func.func @_h_swish_kernel(%arg0: i32, %arg1: memref<2x1024xf32, #tpu.memory_space<vmem>>, %arg2: memref<2x1024xf32, #tpu.memory_space<vmem>>) attributes {dimension_semantics = [#tpu.dimension_semantics<parallel>], iteration_bounds = array<i64: 1>, scalar_prefetch = 0 : i64, scratch_operands = 0 : i64, tpu.core_type = #tpu.core_type<tc>, window_params = [{transform_indices = @transform_0, window_bounds = array<i64: 2, 1024>}, {transform_indices = @transform_1, window_bounds = array<i64: 2, 1024>}]} {
    %c0 = arith.constant 0 : index
    %c0_0 = arith.constant 0 : index
    %0 = vector.load %arg1[%c0, %c0_0] : memref<2x1024xf32, #tpu.memory_space<vmem>>, vector<2x1024xf32>
    %cst = arith.constant 3.000000e+00 : f32
    %1 = vector.broadcast %cst : f32 to vector<2x1024xf32>
    %2 = arith.addf %0, %1 : vector<2x1024xf32>
    %cst_1 = arith.constant 0.000000e+00 : f32
    %cst_2 = arith.constant 6.000000e+00 : f32
    %3 = vector.broadcast %cst_1 : f32 to vector<2x1024xf32>
    %4 = arith.maximumf %3, %2 : vector<2x1024xf32>
    %5 = vector.broadcast %cst_2 : f32 to vector<2x1024xf32>
    %6 = arith.minimumf %5, %4 : vector<2x1024xf32>
    %cst_3 = arith.constant 0.166666672 : f32
    %7 = vector.broadcast %cst_3 : f32 to vector<2x1024xf32>
    %8 = arith.mulf %6, %7 : vector<2x1024xf32>
    %9 = arith.mulf %0, %8 : vector<2x1024xf32>
    %c0_4 = arith.constant 0 : index
    %c0_5 = arith.constant 0 : index
    %10 = vector.load %arg2[%c0_4, %c0_5] : memref<2x1024xf32, #tpu.memory_space<vmem>>, vector<2x1024xf32>
    tpu.vector_store %arg2[%c0_4, %c0_5], %9 {strides = array<i32>} : memref<2x1024xf32, #tpu.memory_space<vmem>>, vector<2x1024xf32>,
    return
  }
  func.func @transform_0(%arg0: i32) -> (i32, i32) {
    %c0_i32 = arith.constant 0 : i32
    %c0_i32_0 = arith.constant 0 : i32
    return %arg0, %c0_i32 : i32, i32
  }
  func.func @transform_1(%arg0: i32) -> (i32, i32) {
    %c0_i32 = arith.constant 0 : i32
    %c0_i32_0 = arith.constant 0 : i32
    return %arg0, %c0_i32 : i32, i32
  }
}

</mosaic_0001>

<llo_original>
// kernel: tpu_custom_call.1
$region0: #{tpu_custom_call.1}
  #allocation0 [shape = 'u32[]', space=smem, size = 0x4, offset = 0x4, fixed_abs, tag = 'smem constant byte address 0x4 - core index']
  #allocation1 [shape = 'u32[144,128]{1,0:T(1,128)}', space=vmem, size = 0x12000, scoped, tag = 'internal scratch']
  %s0 = inlined_call_operand.hbm [shape: f32[2,1024], index: 0, kind: input, shape index: {}]
  %s1 = inlined_call_operand.hbm [shape: f32[2,1024], index: 1, kind: output, shape index: {}]
  %s2 = sld [smem:[#allocation0]]
  $region18: #{tpu_custom_call.1} parent=0
    _
  %s4 = ssub.s32 1, %s2
  %s5 = scalar_select 0, %s4, %s2
  $region1: #{tpu_custom_call.1} parent=0
    #allocation2 [shape = 'u8[8192]{0}', space=vmem, size = 0x2000, scoped, tag = 'input window, operand 0, single buffered']
    #allocation3 [shape = 's32[1]{0}', space=sflag, size = 0x4, scoped, tag = 'scoped memory for tpu_custom_call.1']
    #allocation4 [shape = 's32[1]{0}', space=sflag, size = 0x4, scoped, tag = 'scoped memory for tpu_custom_call.1']
    #allocation5 [shape = 'u8[8192]{0}', space=vmem, size = 0x2000, scoped, tag = 'output window, operand 0, single buffered']
    %6 = vsyncpa [#allocation3], 0
    %7 = vsyncpa [#allocation4], 0
    // Predicated region
    $region2: #{tpu_custom_call.1} parent=1 // pred_check
      _
    $region3: #{tpu_custom_call.1} parent=1 // pred_check_branch
      %9 = sbr.rel (0) target = $region5
    $region4: #{tpu_custom_call.1} parent=1 // pred_region
      %s11 = ssub.s32 256, 256
      %12 = vsyncadd [#allocation3], %s11
      %s14 = sshll.u32 [#allocation2], 4
      %s15 = int_to_ptr.vmem [resolvable:$true] %s14
      %17 = dma.hbm_to_vmem [thread:$0]  %s0, 256, %s15, [#allocation3]
    $region5: #{tpu_custom_call.1} parent=1 // pred_fallthru
      _
    // Predicated region
    $region6: #{tpu_custom_call.1} parent=1 // pred_check
      _
    $region7: #{tpu_custom_call.1} parent=1 // pred_check_branch
      %19 = sbr.rel (0) target = $region9
    $region8: #{tpu_custom_call.1} parent=1 // pred_region
      %20 = dma.done [#allocation3], 256
    $region9: #{tpu_custom_call.1} parent=1 // pred_fallthru
      _
    %v21 = vld [vmem:[#allocation2] sm:$0xff]
    %v22 = vld [vmem:[#allocation2 + $0x8] sm:$0xff]
    %v23 = vadd.f32 %v21, 3.0
    %v24 = vadd.f32 %v22, 3.0
    %v25 = vmax.f32 %v23, 0.0
    %v26 = vmax.f32 %v24, 0.0
    %v27 = vmin.f32 %v25, 6.0
    %v28 = vmin.f32 %v26, 6.0
    %v29 = vmul.f32 %v27, 0.16666667
    %v30 = vmul.f32 %v28, 0.16666667
    %v31 = vmul.f32 %v21, %v29
    %v32 = vmul.f32 %v22, %v30
    %33 = vst [vmem:[#allocation5] sm:$0xff] %v31
    %34 = vst [vmem:[#allocation5 + $0x8] sm:$0xff] %v32
    // Predicated region
    $region10: #{tpu_custom_call.1} parent=1 // pred_check
      _
    $region11: #{tpu_custom_call.1} parent=1 // pred_check_branch
      %36 = sbr.rel (0) target = $region13
    $region12: #{tpu_custom_call.1} parent=1 // pred_region
      %s38 = ssub.s32 256, 256
      %39 = vsyncadd [#allocation4], %s38
      %s41 = sshll.u32 [#allocation5], 4
      %s42 = int_to_ptr.vmem [resolvable:$true] %s41
      %44 = dma.vmem_to_hbm [thread:$0]  %s42, 256, %s1, [#allocation4]
    $region13: #{tpu_custom_call.1} parent=1 // pred_fallthru
      _
    // Predicated region
    $region14: #{tpu_custom_call.1} parent=1 // pred_check
      _
    $region15: #{tpu_custom_call.1} parent=1 // pred_check_branch
      %46 = sbr.rel (0) target = $region17
    $region16: #{tpu_custom_call.1} parent=1 // pred_region
      %47 = dma.done [#allocation4], 256
    $region17: #{tpu_custom_call.1} parent=1 // pred_fallthru
      _
    %48 = vsyncpa [#allocation3], 1
    %49 = vsyncpa [#allocation4], 1

</llo_original>
